<compile_context>
chip_gen: v5e
topology: v5e:2x2
jax: 0.10.0
libtpu: 0.0.40
codegen_flags: <defaults>
</compile_context>

<pallas_src>
import math

import jax
import jax.numpy as jnp
from jax.experimental import pallas as pl
from jax.experimental.pallas import tpu as pltpu


def sine_encoding_kernel(e_ref, div2_ref, phase_ref, w0_ref, wsc_ref, b_ref,
                         o_ref):
    # e_ref:     [tile_n, 1]   eigenvalues
    # div2_ref:  [1, Hp]       [100*div | 100*div], zero-padded to Hp lanes
    # phase_ref: [1, Hp]       [0 | pi/2],          zero-padded to Hp lanes
    # w0_ref:    [1, Hp]       W^T row for the raw-eigenvalue feature
    # wsc_ref:   [Hp, Hp]      W^T rows for the [sin | cos] features (zero-padded)
    # b_ref:     [1, Hp]       bias (zero-padded)
    # o_ref:     [tile_n, Hp]
    e = e_ref[...]                                            # [tile_n, 1]
    # Single full-lane sin replaces sin + cos + concatenate.
    feat = jnp.sin(e * div2_ref[...] + phase_ref[...])        # [tile_n, Hp]
    # One lane-dense K=Hp MXU matmul for the sin/cos features.
    out = jnp.dot(feat, wsc_ref[...], preferred_element_type=jnp.float32)
    # Rank-1 raw-eigenvalue term + bias stay on the VPU.
    out = out + e * w0_ref[...] + b_ref[...]
    o_ref[...] = out.astype(o_ref.dtype)


def _auto_tile_n(n, max_tile=2048):
    # Big tiles amortize per-step overhead; >=2 steps lets v7x megacore shard
    # rows across both TensorCores.  2048 is a v5e-safe ceiling.
    half = (n + 1) // 2
    return max(8, min(max_tile, ((half + 7) // 8) * 8))


def sine_encoding(e, weight, bias, hidden_dim, *, tile_n=None):
    """e: [N] float; weight: [H, H+1] (PyTorch nn.Linear layout); bias: [H]."""
    assert hidden_dim % 2 == 0, "hidden_dim must be even (arange(0, H, 2))"
    n = e.shape[0]
    h = hidden_dim
    half = h // 2
    h_pad = ((h + 127) // 128) * 128          # lane-dense output => unmasked vst

    # ---- host-side parameter prep (constants / reshapes, done once) ----
    div = jnp.exp(jnp.arange(0, h, 2, dtype=jnp.float32)
                  * (-math.log(10000.0) / h)) * 100.0          # [H/2], x100 folded
    div2 = jnp.concatenate([div, div]).reshape(1, h)           # [1, H]
    phase = jnp.concatenate(
        [jnp.zeros((half,), jnp.float32),
         jnp.full((half,), math.pi / 2.0, jnp.float32)]).reshape(1, h)

    wt = weight.astype(jnp.float32).T                          # [H+1, H]
    w0 = wt[0:1, :]                                            # [1, H]
    wsc = wt[1:, :]                                            # [H, H] = [ws; wc]
    b_row = bias.reshape(1, h).astype(jnp.float32)             # [1, H]

    if h_pad != h:
        lane_pad = ((0, 0), (0, h_pad - h))
        div2 = jnp.pad(div2, lane_pad)     # zero pad lanes -> sin(0)=0 features
        phase = jnp.pad(phase, lane_pad)
        w0 = jnp.pad(w0, lane_pad)
        b_row = jnp.pad(b_row, lane_pad)
        wsc = jnp.pad(wsc, ((0, h_pad - h), (0, h_pad - h)))   # zero K rows too

    e_col = e.reshape(n, 1).astype(jnp.float32)

    if n <= 1024:
        # Small N: single ungridded invocation (launch-latency bound; a grid
        # would only add per-step overhead).  Blocks == full arrays.
        vmem = pl.BlockSpec(memory_space=pltpu.MemorySpace.VMEM)
        out = pl.pallas_call(
            sine_encoding_kernel,
            out_shape=jax.ShapeDtypeStruct((n, h_pad), jnp.float32),
            in_specs=[vmem] * 6,
            out_specs=vmem,
        )(e_col, div2, phase, w0, wsc, b_row)
    else:
        if tile_n is None:
            tile_n = _auto_tile_n(n)
        assert tile_n % 8 == 0
        # Large N: tile rows; constants use constant index maps so they stay
        # VMEM-resident across iterations; row axis is parallel (megacore).
        out = pl.pallas_call(
            sine_encoding_kernel,
            out_shape=jax.ShapeDtypeStruct((n, h_pad), jnp.float32),
            grid_spec=pltpu.PrefetchScalarGridSpec(
                num_scalar_prefetch=0,
                grid=(pl.cdiv(n, tile_n),),
                in_specs=[
                    pl.BlockSpec((tile_n, 1), lambda i: (i, 0)),
                    pl.BlockSpec((1, h_pad), lambda i: (0, 0)),
                    pl.BlockSpec((1, h_pad), lambda i: (0, 0)),
                    pl.BlockSpec((1, h_pad), lambda i: (0, 0)),
                    pl.BlockSpec((h_pad, h_pad), lambda i: (0, 0)),
                    pl.BlockSpec((1, h_pad), lambda i: (0, 0)),
                ],
                out_specs=pl.BlockSpec((tile_n, h_pad), lambda i: (i, 0)),
            ),
            compiler_params=pltpu.CompilerParams(
                dimension_semantics=("parallel",)),
        )(e_col, div2, phase, w0, wsc, b_row)

    return out[:, :h] if h_pad != h else out


def sine_encoding_ref(e, weight, bias, hidden_dim):
    """Pure-JAX reference matching the PyTorch forward exactly."""
    h = hidden_dim
    ee = e * 100.0
    div = jnp.exp(jnp.arange(0, h, 2, dtype=jnp.float32)
                  * (-math.log(10000.0) / h))
    pe = ee[:, None] * div
    eeig = jnp.concatenate([e[:, None], jnp.sin(pe), jnp.cos(pe)], axis=1)
    return jnp.dot(eeig, weight.T, precision=jax.lax.Precision.HIGHEST) + bias


def _make_params(kw, kb, hidden):
    fan_in, fan_out = hidden + 1, hidden
    limit = math.sqrt(6.0 / (fan_in + fan_out))
    weight = jax.random.uniform(kw, (hidden, hidden + 1),
                                minval=-limit, maxval=limit, dtype=jnp.float32)
    b_limit = 1.0 / math.sqrt(fan_in)
    bias = jax.random.uniform(kb, (hidden,),
                              minval=-b_limit, maxval=b_limit, dtype=jnp.float32)
    return weight, bias


if __name__ == "__main__":
    key = jax.random.PRNGKey(0)
    k_e, k_w, k_b, k_e2, k_w2, k_b2 = jax.random.split(key, 6)

    # --- small shape (module with a reduced hidden size), ungridded path ---
    N, HIDDEN = 8, 32
    e = jax.random.normal(k_e, (N,), dtype=jnp.float32)
    weight, bias = _make_params(k_w, k_b, HIDDEN)

    out = jax.block_until_ready(sine_encoding(e, weight, bias, HIDDEN))
    ref = sine_encoding_ref(e, weight, bias, HIDDEN)
    assert out.shape == (N, HIDDEN)
    # Tolerance covers the (e*100)*div -> e*(100*div) reassociation and the
    # cos(x) == sin(x + pi/2) phase trick (~1 ulp of pe each).
    assert jnp.allclose(out, ref, atol=1e-3, rtol=1e-3), "small-shape mismatch"

    # --- larger shape exercising the tiled (gridded) path at default H=128 ---
    N2, HIDDEN2 = 2048, 128
    e2 = jax.random.normal(k_e2, (N2,), dtype=jnp.float32)
    weight2, bias2 = _make_params(k_w2, k_b2, HIDDEN2)

    out2 = jax.block_until_ready(sine_encoding(e2, weight2, bias2, HIDDEN2))
    ref2 = sine_encoding_ref(e2, weight2, bias2, HIDDEN2)
    assert out2.shape == (N2, HIDDEN2)
    assert jnp.allclose(out2, ref2, atol=2e-3, rtol=2e-3), "tiled-path mismatch"

    print("KERNEL_OK")
</pallas_src>

<mosaic_0001>
module attributes {stable_mosaic.version = 11 : i64} {
  func.func @sine_encoding_kernel(%arg0: memref<8x1xf32, #tpu.memory_space<vmem>>, %arg1: memref<1x128xf32, #tpu.memory_space<vmem>>, %arg2: memref<1x128xf32, #tpu.memory_space<vmem>>, %arg3: memref<1x128xf32, #tpu.memory_space<vmem>>, %arg4: memref<128x128xf32, #tpu.memory_space<vmem>>, %arg5: memref<1x128xf32, #tpu.memory_space<vmem>>, %arg6: memref<8x128xf32, #tpu.memory_space<vmem>>) attributes {dimension_semantics = [], scalar_prefetch = 0 : i64, scratch_operands = 0 : i64, tpu.core_type = #tpu.core_type<tc>} {
    %c0 = arith.constant 0 : index
    %c0_0 = arith.constant 0 : index
    %0 = vector.load %arg0[%c0, %c0_0] : memref<8x1xf32, #tpu.memory_space<vmem>>, vector<8x1xf32>
    %c0_1 = arith.constant 0 : index
    %c0_2 = arith.constant 0 : index
    %1 = vector.load %arg1[%c0_1, %c0_2] : memref<1x128xf32, #tpu.memory_space<vmem>>, vector<1x128xf32>
    %2 = vector.broadcast %0 : vector<8x1xf32> to vector<8x128xf32>
    %3 = vector.broadcast %1 : vector<1x128xf32> to vector<8x128xf32>
    %4 = arith.mulf %2, %3 : vector<8x128xf32>
    %c0_3 = arith.constant 0 : index
    %c0_4 = arith.constant 0 : index
    %5 = vector.load %arg2[%c0_3, %c0_4] : memref<1x128xf32, #tpu.memory_space<vmem>>, vector<1x128xf32>
    %6 = vector.broadcast %5 : vector<1x128xf32> to vector<8x128xf32>
    %7 = arith.addf %4, %6 : vector<8x128xf32>
    %8 = math.sin %7 : vector<8x128xf32>
    %c0_5 = arith.constant 0 : index
    %c0_6 = arith.constant 0 : index
    %9 = vector.load %arg4[%c0_5, %c0_6] : memref<128x128xf32, #tpu.memory_space<vmem>>, vector<128x128xf32>
    %cst = arith.constant dense<0.000000e+00> : vector<8x128xf32>
    %10 = tpu.matmul %8, %9, %cst {dimension_numbers = #tpu.dot_dimension_numbers<[1], [0], [0], [1], [0, 0, 1, 1], [], []>} : vector<8x128xf32>, vector<128x128xf32>, vector<8x128xf32> -> vector<8x128xf32>
    %c0_7 = arith.constant 0 : index
    %c0_8 = arith.constant 0 : index
    %11 = vector.load %arg3[%c0_7, %c0_8] : memref<1x128xf32, #tpu.memory_space<vmem>>, vector<1x128xf32>
    %12 = vector.broadcast %0 : vector<8x1xf32> to vector<8x128xf32>
    %13 = vector.broadcast %11 : vector<1x128xf32> to vector<8x128xf32>
    %14 = arith.mulf %12, %13 : vector<8x128xf32>
    %15 = arith.addf %10, %14 : vector<8x128xf32>
    %c0_9 = arith.constant 0 : index
    %c0_10 = arith.constant 0 : index
    %16 = vector.load %arg5[%c0_9, %c0_10] : memref<1x128xf32, #tpu.memory_space<vmem>>, vector<1x128xf32>
    %17 = vector.broadcast %16 : vector<1x128xf32> to vector<8x128xf32>
    %18 = arith.addf %15, %17 : vector<8x128xf32>
    %c0_11 = arith.constant 0 : index
    %c0_12 = arith.constant 0 : index
    %19 = vector.load %arg6[%c0_11, %c0_12] : memref<8x128xf32, #tpu.memory_space<vmem>>, vector<8x128xf32>
    tpu.vector_store %arg6[%c0_11, %c0_12], %18 {strides = array<i32>} : memref<8x128xf32, #tpu.memory_space<vmem>>, vector<8x128xf32>,
    return
  }
}

</mosaic_0001>

<llo_original>
// kernel: tpu_custom_call.1
$region0: #{tpu_custom_call.1}
  #allocation0 [shape = 'u32[]', space=smem, size = 0x4, offset = 0x4, fixed_abs, tag = 'smem constant byte address 0x4 - core index']
  #allocation1 [shape = 'u32[72,128]{1,0:T(1,128)}', space=vmem, size = 0x9000, scoped, tag = 'internal scratch']
  %s0 = inlined_call_operand.vmem [shape: f32[8,1], index: 0, kind: input, shape index: {}]
  %s1 = inlined_call_operand.vmem [shape: f32[1,128], index: 1, kind: input, shape index: {}]
  %s2 = inlined_call_operand.vmem [shape: f32[1,128], index: 2, kind: input, shape index: {}]
  %s3 = inlined_call_operand.vmem [shape: f32[1,128], index: 3, kind: input, shape index: {}]
  %s4 = inlined_call_operand.hbm [shape: f32[128,128], index: 4, kind: input, shape index: {}]
  %s5 = inlined_call_operand.vmem [shape: f32[1,128], index: 5, kind: input, shape index: {}]
  %s6 = inlined_call_operand.hbm [shape: f32[8,128], index: 6, kind: output, shape index: {}]
  %s7 = sld [smem:[#allocation0]]
  $region38: #{tpu_custom_call.1} parent=0
    _
  %s9 = ssub.s32 1, %s7
  %s10 = scalar_select 0, %s9, %s7
  $region1: #{tpu_custom_call.1} parent=0
    #allocation2 [shape = 'u8[65536]{0}', space=vmem, size = 0x10000, scoped, tag = 'input window, operand 4, single buffered']
    #allocation3 [shape = 's32[1]{0}', space=sflag, size = 0x4, scoped, tag = 'scoped memory for tpu_custom_call.1']
    #allocation4 [shape = 's32[1]{0}', space=sflag, size = 0x4, scoped, tag = 'scoped memory for tpu_custom_call.1']
    #allocation5 [shape = 'u8[4096]{0}', space=vmem, size = 0x1000, scoped, tag = 'output window, operand 0, single buffered']
    %11 = vsyncpa [#allocation3], 0
    %12 = vsyncpa [#allocation4], 0
    // Predicated region
    $region2: #{tpu_custom_call.1} parent=1 // pred_check
      _
    $region3: #{tpu_custom_call.1} parent=1 // pred_check_branch
      %14 = sbr.rel (0) target = $region5
    $region4: #{tpu_custom_call.1} parent=1 // pred_region
      _
    $region5: #{tpu_custom_call.1} parent=1 // pred_fallthru
      _
    // Predicated region
    $region6: #{tpu_custom_call.1} parent=1 // pred_check
      _
    $region7: #{tpu_custom_call.1} parent=1 // pred_check_branch
      %16 = sbr.rel (0) target = $region9
    $region8: #{tpu_custom_call.1} parent=1 // pred_region
      _
    $region9: #{tpu_custom_call.1} parent=1 // pred_fallthru
      _
    // Predicated region
    $region10: #{tpu_custom_call.1} parent=1 // pred_check
      _
    $region11: #{tpu_custom_call.1} parent=1 // pred_check_branch
      %18 = sbr.rel (0) target = $region13
    $region12: #{tpu_custom_call.1} parent=1 // pred_region
      _
    $region13: #{tpu_custom_call.1} parent=1 // pred_fallthru
      _
    // Predicated region
    $region14: #{tpu_custom_call.1} parent=1 // pred_check
      _
    $region15: #{tpu_custom_call.1} parent=1 // pred_check_branch
      %20 = sbr.rel (0) target = $region17
    $region16: #{tpu_custom_call.1} parent=1 // pred_region
      _
    $region17: #{tpu_custom_call.1} parent=1 // pred_fallthru
      _
    // Predicated region
    $region18: #{tpu_custom_call.1} parent=1 // pred_check
      _
    $region19: #{tpu_custom_call.1} parent=1 // pred_check_branch
      %22 = sbr.rel (0) target = $region21
    $region20: #{tpu_custom_call.1} parent=1 // pred_region
      %24 = vsyncadd [#allocation3], 0
      %s25 = sshll.u32 %s4, 4
      %s26 = int_to_ptr.hbm [resolvable:$true] %s25
      %s27 = sshll.u32 [#allocation2], 4
      %s28 = int_to_ptr.vmem [resolvable:$true] %s27
      %33 = dma.hbm_to_vmem [thread:$0]  %s26, 2048, %s28, [#allocation3], 128, 128, 8
    $region21: #{tpu_custom_call.1} parent=1 // pred_fallthru
      _
    // Predicated region
    $region22: #{tpu_custom_call.1} parent=1 // pred_check
      _
    $region23: #{tpu_custom_call.1} parent=1 // pred_check_branch
      %35 = sbr.rel (0) target = $region25
    $region24: #{tpu_custom_call.1} parent=1 // pred_region
      _
    $region25: #{tpu_custom_call.1} parent=1 // pred_fallthru
      _
    // Predicated region
    $region26: #{tpu_custom_call.1} parent=1 // pred_check
      _
    $region27: #{tpu_custom_call.1} parent=1 // pred_check_branch
      %37 = sbr.rel (0) target = $region29
    $region28: #{tpu_custom_call.1} parent=1 // pred_region
      %39 = dma.done [#allocation3], 2048
    $region29: #{tpu_custom_call.1} parent=1 // pred_fallthru
      _
    %v40 = vld [vmem:[%s0] sm:$0xff]
    %v41 = vld [vmem:[%s1] sm:$0x1]
    %43 = vset.pattern.permute.xlu0 0
    %44 = vperm.xlu0 %43, %v40
    %v45 = vpop.permute.xlu0 %44
    %v48 = vperm.slane %v41, 0
    %v50 = vmul.f32 %v45, %v48
    %v51 = vld [vmem:[%s2] sm:$0x1]
    %v53 = vperm.slane %v51, 0
    %v55 = vadd.f32 %v50, %v53
    %v56 = vand.u32 2147483647, %v55
    %vm57 = vcmp.le.f32.partialorder %v56, 0.7853982
    %vm58 = vcmp.lt.s32.totalorder %v55, 0
    %v59 = vand.u32 %v55, 2139095040
    %v60 = vshrl.u32 %v59, 23
    %v61 = vsub.s32 %v60, 127
    %v62 = vand.u32 2147483647, %v55
    %v63 = vand.u32 %v62, 8388607
    %v64 = vor.u32 %v63, 8388608
    %v65 = vsub.s32 0, %v64
    %v66 = vadd.s32 %v61, 1
    %vm67 = vcmp.gt.s32.totalorder %v66, 0
    %v68 = vsel %vm67, %v66, 0
    %v69 = vshrl.u32 %v68, 5
    %v70 = vand.u32 %v68, 31
    %v71 = vsub.s32 32, %v70
    %v72 = vshrl.u32 683565275, %v71
    %v73 = vshll.u32 683565275, %v70
    %v74 = vshrl.u32 2475754826, %v71
    %v75 = vor.u32 %v73, %v74
    %v76 = vshll.u32 2475754826, %v70
    %v77 = vshrl.u32 2131351028, %v71
    %v78 = vor.u32 %v76, %v77
    %v79 = vshll.u32 2131351028, %v70
    %v80 = vshrl.u32 2102212464, %v71
    %v81 = vor.u32 %v79, %v80
    %v82 = vshll.u32 2102212464, %v70
    %v83 = vshrl.u32 920167782, %v71
    %v84 = vor.u32 %v82, %v83
    %v85 = vshll.u32 920167782, %v70
    %v86 = vshrl.u32 1326507024, %v71
    %v87 = vor.u32 %v85, %v86
    %vm88 = vcmp.lt.s32.totalorder %v69, 1
    %vm89 = vcmp.lt.s32.totalorder %v69, 2
    %vm90 = vcmp.lt.s32.totalorder %v69, 3
    %vm91 = vcmp.lt.s32.totalorder %v69, 4
    %v92 = vsel %vm88, %v72, %v75
    %v93 = vsel %vm91, %v81, 2102212464
    %v94 = vsel %vm90, %v78, %v93
    %v95 = vsel %vm89, %v92, %v94
    %v96 = vsel %vm88, %v75, %v78
    %v97 = vsel %vm91, %v84, 920167782
    %v98 = vsel %vm90, %v81, %v97
    %v99 = vsel %vm89, %v96, %v98
    %v100 = vsel %vm88, %v78, %v81
    %v101 = vsel %vm91, %v87, 1326507024
    %v102 = vsel %vm90, %v84, %v101
    %v103 = vsel %vm89, %v100, %v102
    %v104 = vshll.u32 %v64, 8
    %v105 = vand.u32 %v104, 65535
    %v106 = vshrl.u32 %v104, 16
    %v107 = vand.u32 %v103, 65535
    %v108 = vshrl.u32 %v103, 16
    %v109 = vmul.u32 %v105, %v107
    %v110 = vmul.u32 %v105, %v108
    %v111 = vmul.u32 %v106, %v107
    %v112 = vmul.u32 %v106, %v108
    %v113 = vshll.u32 %v110, 16
    %v114 = vshrl.u32 %v110, 16
    %v115 = vshll.u32 %v111, 16
    %v116 = vshrl.u32 %v111, 16
    %vm117 = vc.u32 %v109, %v113
    %v118 = vsel %vm117, 1, 0
    %v119 = vadd.s32 %v109, %v113
    %v120 = vadd.s32 %v112, %v118
    %vm121 = vc.u32 %v119, %v115
    %v122 = vsel %vm121, 1, 0
    %v123 = vadd.s32 %v119, %v115
    %v124 = vadd.s32 %v120, %v122
    %v125 = vadd.s32 %v124, %v114
    %v126 = vadd.s32 %v125, %v116
    %v127 = vand.u32 %v104, 65535
    %v128 = vshrl.u32 %v104, 16
    %v129 = vand.u32 %v99, 65535
    %v130 = vshrl.u32 %v99, 16
    %v131 = vmul.u32 %v127, %v129
    %v132 = vmul.u32 %v127, %v130
    %v133 = vmul.u32 %v128, %v129
    %v134 = vmul.u32 %v128, %v130
    %v135 = vshll.u32 %v132, 16
    %v136 = vshrl.u32 %v132, 16
    %v137 = vshll.u32 %v133, 16
    %v138 = vshrl.u32 %v133, 16
    %vm139 = vc.u32 %v131, %v135
    %v140 = vsel %vm139, 1, 0
    %v141 = vadd.s32 %v131, %v135
    %v142 = vadd.s32 %v134, %v140
    %vm143 = vc.u32 %v141, %v137
    %v144 = vsel %vm143, 1, 0
    %v145 = vadd.s32 %v141, %v137
    %v146 = vadd.s32 %v142, %v144
    %v147 = vadd.s32 %v146, %v136
    %v148 = vadd.s32 %v147, %v138
    %v149 = vmul.u32 %v104, %v95
    %v150 = vadd.s32 %v126, %v145
    %vm151 = vc.u32 %v126, %v145
    %v152 = vadd.s32 %v148, 1
    %v153 = vsel %vm151, %v152, %v148
    %v154 = vadd.s32 %v149, %v153
    %v155 = vadd.s32 %v154, 536870912
    %v156 = vshrl.u32 %v155, 30
    %v157 = vshll.u32 %v156, 30
    %v158 = vsub.s32 %v154, %v157
    %vm159 = vcmp.lt.s32.totalorder %v158, 0
    %v160 = vsub.s32 0, %v158
    %v161 = vsel %vm159, %v160, %v158
    %v162 = vclz %v161
    %v163 = vsub.s32 %v162, 2
    %vm164 = vcmp.gt.s32.totalorder 0, %v163
    %v165 = vsel %vm164, 0, %v163
    %v166 = vsub.s32 32, %v165
    %v167 = vshll.u32 %v158, %v165
    %v168 = vshrl.u32 %v150, %v166
    %v169 = vor.u32 %v167, %v168
    %v170 = vsub.s32 4294967266, %v165
    %v171 = vadd.s32 %v170, 127
    %v172 = vshll.u32 %v171, 23
    %v173 = vor.u32 4788187, %v172
    %v174 = vand.u32 2147483647, %v173
    %v176 = vcvt.s32.f32 %v169
    %v177 = vmul.f32 %v176, %v174
    %v178 = vxor.u32 %v177, 2147483648
    %v179 = vsel %vm58, %v178, %v177
    %v180 = vsub.s32 4, %v156
    %v181 = vsel %vm58, %v180, %v156
    %v182 = vsel %vm57, %v55, %v179
    %v183 = vsel %vm57, 0, %v181
    %v184 = vmul.f32 %v182, %v182
    %v185 = vmul.f32 %v184, -0.001358992
    %v186 = vadd.f32 %v185, 0.041655596
    %v187 = vmul.f32 %v184, %v186
    %v188 = vadd.f32 %v187, -0.4999988
    %v189 = vmul.f32 %v184, %v188
    %v190 = vadd.f32 1.0, %v189
    %v191 = vmul.f32 %v182, %v182
    %v192 = vmul.f32 %v191, -0.00019511016
    %v193 = vadd.f32 %v192, 0.008332121
    %v194 = vmul.f32 %v191, %v193
    %v195 = vadd.f32 %v194, -0.16666654
    %v196 = vmul.f32 %v191, %v195
    %v197 = vadd.f32 %v196, 1.0
    %v198 = vmul.f32 %v197, %v182
    %vm199 = vweird.f32 %v55
    %v200 = vadd.s32 %v183, 3
    %v201 = vand.u32 %v200, 3
    %vm202 = vcmp.lt.s32.totalorder %v201, 2
    %vm203 = vcmp.eq.s32.totalorder %v201, 0
    %v204 = vxor.u32 %v198, 2147483648
    %v205 = vsel %vm203, %v190, %v204
    %vm206 = vcmp.eq.s32.totalorder %v201, 2
    %v207 = vxor.u32 %v190, 2147483648
    %v208 = vsel %vm206, %v207, %v198
    %v209 = vsel %vm202, %v205, %v208
    %v210 = vsel %vm199, nan, %v209
    %v211 = vld [vmem:[#allocation2] sm:$0xff]
    %v212 = vld [vmem:[#allocation2 + $0x8] sm:$0xff]
    %v213 = vld [vmem:[#allocation2 + $0x10] sm:$0xff]
    %v214 = vld [vmem:[#allocation2 + $0x18] sm:$0xff]
    %v215 = vld [vmem:[#allocation2 + $0x20] sm:$0xff]
    %v216 = vld [vmem:[#allocation2 + $0x28] sm:$0xff]
    %v217 = vld [vmem:[#allocation2 + $0x30] sm:$0xff]
    %v218 = vld [vmem:[#allocation2 + $0x38] sm:$0xff]
    %v219 = vld [vmem:[#allocation2 + $0x40] sm:$0xff]
    %v220 = vld [vmem:[#allocation2 + $0x48] sm:$0xff]
    %v221 = vld [vmem:[#allocation2 + $0x50] sm:$0xff]
    %v222 = vld [vmem:[#allocation2 + $0x58] sm:$0xff]
    %v223 = vld [vmem:[#allocation2 + $0x60] sm:$0xff]
    %v224 = vld [vmem:[#allocation2 + $0x68] sm:$0xff]
    %v225 = vld [vmem:[#allocation2 + $0x70] sm:$0xff]
    %v226 = vld [vmem:[#allocation2 + $0x78] sm:$0xff]
    %v227 = vld [vmem:[%s3] sm:$0x1]
    %v229 = vperm.slane %v227, 0
    %v231 = vmul.f32 %v45, %v229
    %232 = vmatpush.msra.mxu0 %v226
    %233 = vmatpush.msra.mxu0 %v225
    %234 = vmatpush.msra.mxu0 %v224
    %235 = vmatpush.msra.mxu0 %v223
    %236 = vmatpush.msra.mxu0 %v222
    %237 = vmatpush.msra.mxu0 %v221
    %238 = vmatpush.msra.mxu0 %v220
    %239 = vmatpush.msra.mxu0 %v219
    %240 = vmatpush.msra.mxu0 %v218
    %241 = vmatpush.msra.mxu0 %v217
    %242 = vmatpush.msra.mxu0 %v216
    %243 = vmatpush.msra.mxu0 %v215
    %244 = vmatpush.msra.mxu0 %v214
    %245 = vmatpush.msra.mxu0 %v213
    %246 = vmatpush.msra.mxu0 %v212
    %247 = vmatpush.msra.mxu0 %v211
    %248 = vmatmul.f32.gmra.mxu0 %v210
    %v249 = vpop.f32.mrf.mxu0
    %v250 = vadd.f32 %v231, %v249
    %251 = vdwg.mxu0
    %v252 = vld [vmem:[%s5] sm:$0x1]
    %v254 = vperm.slane %v252, 0
    %v256 = vadd.f32 %v250, %v254
    %257 = vst [vmem:[#allocation5] sm:$0xff] %v256
    // Predicated region
    $region30: #{tpu_custom_call.1} parent=1 // pred_check
      _
    $region31: #{tpu_custom_call.1} parent=1 // pred_check_branch
      %259 = sbr.rel (0) target = $region33
    $region32: #{tpu_custom_call.1} parent=1 // pred_region
      %261 = vsyncadd [#allocation4], 0
      %s263 = sshll.u32 [#allocation5], 4
      %s264 = int_to_ptr.vmem [resolvable:$true] %s263
      %s265 = sshll.u32 %s6, 4
      %s266 = int_to_ptr.hbm [resolvable:$true] %s265
      %268 = dma.vmem_to_hbm [thread:$0]  %s264, 128, %s266, [#allocation4]
    $region33: #{tpu_custom_call.1} parent=1 // pred_fallthru
      _
    // Predicated region
    $region34: #{tpu_custom_call.1} parent=1 // pred_check
      _
    $region35: #{tpu_custom_call.1} parent=1 // pred_check_branch
      %270 = sbr.rel (0) target = $region37
    $region36: #{tpu_custom_call.1} parent=1 // pred_region
      %272 = dma.done [#allocation4], 128
    $region37: #{tpu_custom_call.1} parent=1 // pred_fallthru
      _
    %273 = vsyncpa [#allocation3], 1
    %274 = vsyncpa [#allocation4], 1

</llo_original>
